<compile_context>
chip_gen: v5e
topology: v5e:2x2
jax: 0.10.0
libtpu: 0.0.40
codegen_flags: <defaults>
</compile_context>

<pallas_src>
import functools
import itertools
import math

import jax
import jax.numpy as jnp
from jax.experimental import pallas as pl
from jax.experimental.pallas import tpu as pltpu


def _concat_kernel(*refs, offsets):
    """refs = (*in_refs, out_ref); offsets[i] is the static channel start."""
    *in_refs, o_ref = refs
    for x_ref, off in zip(in_refs, offsets):
        c = x_ref.shape[1]
        # Pure VMEM->vreg->VMEM copy into a disjoint (static) channel slice of
        # the output block, in the native dtype.
        o_ref[:, off:off + c, :] = x_ref[...]


def _pick_inner_tile(inner, c_tot, tile_outer, itemsize,
                     vmem_budget=8 * 1024 * 1024, lane=128):
    """Largest lane-aligned divisor of `inner` whose double-buffered
    (inputs + output) footprint stays within `vmem_budget`."""
    if inner % lane != 0:
        return inner  # not 128-aligned: must take the full extent
    # per-step VMEM ~= 2 (inputs + output) * 2 (double buffer)
    #                  * c_tot * tile_inner * tile_outer * itemsize
    cap = max(lane, vmem_budget // (4 * c_tot * tile_outer * itemsize))
    cap = min(inner, (cap // lane) * lane)
    for cand in range(cap, 0, -lane):
        if inner % cand == 0:
            return cand
    return inner


def concat(xs, dimension=1):
    """Pallas equivalent of torch.cat(xs, dim=dimension)."""
    xs = list(xs)
    assert len(xs) >= 1
    rank = xs[0].ndim
    d = dimension % rank
    dtype = xs[0].dtype
    for x in xs:
        assert x.dtype == dtype
        assert x.shape[:d] == xs[0].shape[:d]
        assert x.shape[d + 1:] == xs[0].shape[d + 1:]

    outer = int(math.prod(xs[0].shape[:d]))
    inner = int(math.prod(xs[0].shape[d + 1:]))
    cs = [int(x.shape[d]) for x in xs]
    c_tot = sum(cs)
    offsets = tuple(itertools.accumulate([0] + cs[:-1]))
    out_shape_nd = xs[0].shape[:d] + (c_tot,) + xs[0].shape[d + 1:]

    # Canonical 3-D views: (outer, C_i, inner). Concat axis -> sublane dim,
    # `inner` -> lane (fast) dim.
    xs3 = [x.reshape(outer, c, inner) for x, c in zip(xs, cs)]

    itemsize = jnp.dtype(dtype).itemsize
    tile_outer = 1                                   # always divides outer
    tile_inner = _pick_inner_tile(inner, c_tot, tile_outer, itemsize)
    grid = (outer // tile_outer, inner // tile_inner)

    in_specs = [
        pl.BlockSpec((tile_outer, c, tile_inner), lambda o, j: (o, 0, j))
        for c in cs
    ]
    out_specs = pl.BlockSpec((tile_outer, c_tot, tile_inner),
                             lambda o, j: (o, 0, j))

    # Read every input once + write the output once.
    total_bytes = 2 * outer * c_tot * inner * itemsize

    out3 = pl.pallas_call(
        functools.partial(_concat_kernel, offsets=offsets),
        out_shape=jax.ShapeDtypeStruct((outer, c_tot, inner), dtype),
        grid_spec=pl.GridSpec(grid=grid, in_specs=in_specs,
                              out_specs=out_specs),
        compiler_params=pltpu.CompilerParams(
            dimension_semantics=("parallel", "parallel"),
            vmem_limit_bytes=32 * 1024 * 1024),
        cost_estimate=pl.CostEstimate(flops=0, transcendentals=0,
                                      bytes_accessed=total_bytes),
    )(*xs3)

    return out3.reshape(out_shape_nd)


if __name__ == "__main__":
    key = jax.random.PRNGKey(0)
    k1, k2, k3, k4, k5 = jax.random.split(key, 5)

    # Case 1: YOLO-style channel concat of two NCHW feature maps (f32).
    B, H, W = 2, 16, 16
    x1 = jax.random.normal(k1, (B, 16, H, W), dtype=jnp.float32)
    x2 = jax.random.normal(k2, (B, 16, H, W), dtype=jnp.float32)
    out = jax.block_until_ready(concat([x1, x2], dimension=1))
    ref = jnp.concatenate([x1, x2], axis=1)
    assert out.shape == (B, 32, H, W)
    assert jnp.array_equal(out, ref), "mismatch vs reference (2-way f32)"

    # Case 2: 3-way bf16 channel concat (native-dtype streaming path).
    y1 = jax.random.normal(k3, (B, 16, H, W), dtype=jnp.bfloat16)
    y2 = jax.random.normal(k4, (B, 16, H, W), dtype=jnp.bfloat16)
    y3 = jax.random.normal(k5, (B, 16, H, W), dtype=jnp.bfloat16)
    out2 = jax.block_until_ready(concat([y1, y2, y3], dimension=1))
    ref2 = jnp.concatenate([y1, y2, y3], axis=1)
    assert out2.shape == (B, 48, H, W)
    assert jnp.array_equal(out2, ref2), "mismatch vs reference (3-way bf16)"

    print("KERNEL_OK")
</pallas_src>

<mosaic_0001>
module attributes {stable_mosaic.version = 11 : i64} {
  func.func @_concat_kernel(%arg0: i32, %arg1: i32, %arg2: memref<1x16x256xf32, #tpu.memory_space<vmem>>, %arg3: memref<1x16x256xf32, #tpu.memory_space<vmem>>, %arg4: memref<1x32x256xf32, #tpu.memory_space<vmem>>) attributes {dimension_semantics = [#tpu.dimension_semantics<parallel>, #tpu.dimension_semantics<parallel>], iteration_bounds = array<i64: 2, 1>, scalar_prefetch = 0 : i64, scratch_operands = 0 : i64, tpu.core_type = #tpu.core_type<tc>, window_params = [{transform_indices = @transform_0, window_bounds = array<i64: 1, 16, 256>}, {transform_indices = @transform_1, window_bounds = array<i64: 1, 16, 256>}, {transform_indices = @transform_2, window_bounds = array<i64: 1, 32, 256>}]} {
    %c0 = arith.constant 0 : index
    %c0_0 = arith.constant 0 : index
    %c0_1 = arith.constant 0 : index
    %0 = vector.load %arg2[%c0, %c0_0, %c0_1] : memref<1x16x256xf32, #tpu.memory_space<vmem>>, vector<1x16x256xf32>
    %c0_2 = arith.constant 0 : index
    %c0_3 = arith.constant 0 : index
    %c0_4 = arith.constant 0 : index
    %1 = vector.load %arg4[%c0_2, %c0_3, %c0_4] : memref<1x32x256xf32, #tpu.memory_space<vmem>>, vector<1x16x256xf32>
    tpu.vector_store %arg4[%c0_2, %c0_3, %c0_4], %0 {strides = array<i32>} : memref<1x32x256xf32, #tpu.memory_space<vmem>>, vector<1x16x256xf32>,
    %c0_5 = arith.constant 0 : index
    %c0_6 = arith.constant 0 : index
    %c0_7 = arith.constant 0 : index
    %2 = vector.load %arg3[%c0_5, %c0_6, %c0_7] : memref<1x16x256xf32, #tpu.memory_space<vmem>>, vector<1x16x256xf32>
    %c0_8 = arith.constant 0 : index
    %c16 = arith.constant 16 : index
    %c0_9 = arith.constant 0 : index
    %3 = vector.load %arg4[%c0_8, %c16, %c0_9] : memref<1x32x256xf32, #tpu.memory_space<vmem>>, vector<1x16x256xf32>
    tpu.vector_store %arg4[%c0_8, %c16, %c0_9], %2 {strides = array<i32>} : memref<1x32x256xf32, #tpu.memory_space<vmem>>, vector<1x16x256xf32>,
    return
  }
  func.func @transform_0(%arg0: i32, %arg1: i32) -> (i32, i32, i32) {
    %c0_i32 = arith.constant 0 : i32
    %c0_i32_0 = arith.constant 0 : i32
    return %arg0, %c0_i32, %arg1 : i32, i32, i32
  }
  func.func @transform_1(%arg0: i32, %arg1: i32) -> (i32, i32, i32) {
    %c0_i32 = arith.constant 0 : i32
    %c0_i32_0 = arith.constant 0 : i32
    return %arg0, %c0_i32, %arg1 : i32, i32, i32
  }
  func.func @transform_2(%arg0: i32, %arg1: i32) -> (i32, i32, i32) {
    %c0_i32 = arith.constant 0 : i32
    %c0_i32_0 = arith.constant 0 : i32
    return %arg0, %c0_i32, %arg1 : i32, i32, i32
  }
}

</mosaic_0001>

<llo_original>
// kernel: tpu_custom_call.1
$region0: #{tpu_custom_call.1}
  #allocation0 [shape = 'u32[]', space=smem, size = 0x4, offset = 0x4, fixed_abs, tag = 'smem constant byte address 0x4 - core index']
  #allocation1 [shape = 'u32[72,128]{1,0:T(1,128)}', space=vmem, size = 0x9000, scoped, tag = 'internal scratch']
  %s0 = inlined_call_operand.hbm [shape: f32[2,16,256], index: 0, kind: input, shape index: {}]
  %s1 = inlined_call_operand.hbm [shape: f32[2,16,256], index: 1, kind: input, shape index: {}]
  %s2 = inlined_call_operand.hbm [shape: f32[2,32,256], index: 2, kind: output, shape index: {}]
  %s3 = sld [smem:[#allocation0]]
  $region49: #{tpu_custom_call.1} parent=0
    _
  %s5 = ssub.s32 1, %s3
  %s6 = scalar_select 0, %s5, %s3
  $region1: #{tpu_custom_call.1} parent=0
    #allocation2 [shape = 'u8[32768]{0}', space=vmem, size = 0x8000, scoped, tag = 'input window, operand 0']
    #allocation3 [shape = 's32[2]{0}', space=sflag, size = 0x8, scoped, tag = 'scoped memory for tpu_custom_call.1']
    #allocation4 [shape = 's32[2]{0}', space=sflag, size = 0x8, scoped, tag = 'scoped memory for tpu_custom_call.1']
    #allocation5 [shape = 'u8[32768]{0}', space=vmem, size = 0x8000, scoped, tag = 'input window, operand 1']
    #allocation6 [shape = 's32[2]{0}', space=sflag, size = 0x8, scoped, tag = 'scoped memory for tpu_custom_call.1']
    #allocation7 [shape = 'u8[65536]{0}', space=vmem, size = 0x10000, scoped, tag = 'output window, operand 0']
    %7 = vsyncpa [#allocation3], 0
    %s8 = scalar_lea.sflag [#allocation3], 1
    %9 = vsyncpa %s8, 0
    %10 = vsyncpa [#allocation6], 0
    %s11 = scalar_lea.sflag [#allocation6], 1
    %12 = vsyncpa %s11, 0
    %13 = vsyncpa [#allocation4], 0
    %s14 = scalar_lea.sflag [#allocation4], 1
    %15 = vsyncpa %s14, 0
    loop: start=0, step=1, limit=4
    $region2: #{tpu_custom_call.1} parent=1 // loop_pre_header
      _
    $region3: #{tpu_custom_call.1} parent=1 // loop_header
      %s17 = sphi 0, %s21
      %p18 = scmp.ge.s32.totalorder %s17, 4
      %s24 = sphi 0, %s36
      %s25 = sphi 0, %s32
      %s26 = sphi 0, %s24
      %s27 = sphi 0, %s25
      %s28 = sphi 0, %s26
      %s29 = sphi 0, %s27
      %s41 = sphi 0, %s43
      %s44 = sphi 0, %s41
      %s45 = sphi 0, %s44
      %s61 = sphi 0, %s45
      %s69 = sphi 0, %s71
      %s72 = sphi 0, %s69
      %s73 = sphi 0, %s72
      %s89 = sphi 0, %s73
      %s97 = sphi 0, %s99
      %s100 = sphi 0, %s97
      %s101 = sphi 0, %s100
      %s117 = sphi 0, %s101
    $region4: #{tpu_custom_call.1} parent=1 // loop_header_branch
      %20 = sbr.rel (%p18) target = $region8
    $region5: #{tpu_custom_call.1} parent=1 // loop_body
      %s22 = ssub.s32 %s17, 1
      %s23 = ssub.s32 %s17, 2
      %s30 = sadd.s32 1, %s25
      %p31 = scmp.ge.s32.totalorder %s30, 1
      %s32 = scalar_select %p31, 0, %s30
      %s33 = sadd.s32 1, %s24
      %s34 = scalar_select %p31, %s33, %s24
      %p35 = scmp.ge.s32.totalorder %s34, 2
      %s36 = scalar_select %p35, 0, %s34
      %s37 = ssub.s32 %s24, %s36
      %s38 = ssub.s32 %s25, %s32
      %s39 = sor.u32 %s37, %s38
      %p40 = scmp.eq.s32.totalorder %s39, 0
      %s42 = sadd.s32 %s41, 1
      %s43 = scalar_select %p40, %s41, %s42
      %p46 = pneg %p40
      %p47 = scmp.eq.s32.totalorder %s17, 1
      %p48 = por %p46, %p47
      %p49 = scmp.ne.s32.totalorder %s41, %s44
      %p50 = scmp.eq.s32.totalorder %s17, 0
      %p51 = por %p49, %p50
      %p52 = scmp.ne.s32.totalorder %s41, %s44
      %p53 = scmp.eq.s32.totalorder %s22, 1
      %p54 = por %p52, %p53
      %p55 = scmp.ne.s32.totalorder %s44, %s45
      %p56 = scmp.eq.s32.totalorder %s22, 0
      %p57 = por %p55, %p56
      %p58 = scmp.ne.s32.totalorder %s44, %s45
      %p59 = scmp.eq.s32.totalorder %s23, 1
      %p60 = por %p58, %p59
      %p62 = scmp.ne.s32.totalorder %s45, %s61
      %p63 = scmp.eq.s32.totalorder %s23, 0
      %p64 = por %p62, %p63
      %s65 = ssub.s32 %s24, %s36
      %s66 = ssub.s32 %s25, %s32
      %s67 = sor.u32 %s65, %s66
      %p68 = scmp.eq.s32.totalorder %s67, 0
      %s70 = sadd.s32 %s69, 1
      %s71 = scalar_select %p68, %s69, %s70
      %p74 = pneg %p68
      %p75 = scmp.eq.s32.totalorder %s17, 1
      %p76 = por %p74, %p75
      %p77 = scmp.ne.s32.totalorder %s69, %s72
      %p78 = scmp.eq.s32.totalorder %s17, 0
      %p79 = por %p77, %p78
      %p80 = scmp.ne.s32.totalorder %s69, %s72
      %p81 = scmp.eq.s32.totalorder %s22, 1
      %p82 = por %p80, %p81
      %p83 = scmp.ne.s32.totalorder %s72, %s73
      %p84 = scmp.eq.s32.totalorder %s22, 0
      %p85 = por %p83, %p84
      %p86 = scmp.ne.s32.totalorder %s72, %s73
      %p87 = scmp.eq.s32.totalorder %s23, 1
      %p88 = por %p86, %p87
      %p90 = scmp.ne.s32.totalorder %s73, %s89
      %p91 = scmp.eq.s32.totalorder %s23, 0
      %p92 = por %p90, %p91
      %s93 = ssub.s32 %s24, %s36
      %s94 = ssub.s32 %s25, %s32
      %s95 = sor.u32 %s93, %s94
      %p96 = scmp.eq.s32.totalorder %s95, 0
      %s98 = sadd.s32 %s97, 1
      %s99 = scalar_select %p96, %s97, %s98
      %p102 = pneg %p96
      %p103 = scmp.eq.s32.totalorder %s17, 1
      %p104 = por %p102, %p103
      %p105 = scmp.ne.s32.totalorder %s97, %s100
      %p106 = scmp.eq.s32.totalorder %s17, 0
      %p107 = por %p105, %p106
      %p108 = scmp.ne.s32.totalorder %s97, %s100
      %p109 = scmp.eq.s32.totalorder %s22, 1
      %p110 = por %p108, %p109
      %p111 = scmp.ne.s32.totalorder %s100, %s101
      %p112 = scmp.eq.s32.totalorder %s22, 0
      %p113 = por %p111, %p112
      %p114 = scmp.ne.s32.totalorder %s100, %s101
      %p115 = scmp.eq.s32.totalorder %s23, 1
      %p116 = por %p114, %p115
      %p118 = scmp.ne.s32.totalorder %s101, %s117
      %p119 = scmp.eq.s32.totalorder %s23, 0
      %p120 = por %p118, %p119
      %p121 = scmp.le.s32.totalorder 1, %s17
      %p122 = scmp.lt.s32.totalorder %s17, 3
      %p123 = pnand %p121, %p122
      %p124 = pneg %p123
      // Predicated region
      $region9: #{tpu_custom_call.1} parent=5 // pred_check
        _
      $region10: #{tpu_custom_call.1} parent=5 // pred_check_branch
        %126 = sbr.rel (%p123) target = $region12
      $region11: #{tpu_custom_call.1} parent=5 // pred_region
        %s127 = ssub.s32 %s17, 1
      $region12: #{tpu_custom_call.1} parent=5 // pred_fallthru
        _
      %p128 = scmp.lt.s32.totalorder %s17, 2
      // Predicated region
      $region13: #{tpu_custom_call.1} parent=5 // pred_check
        %p129 = pneg %p128
      $region14: #{tpu_custom_call.1} parent=5 // pred_check_branch
        %131 = sbr.rel (%p129) target = $region16
      $region15: #{tpu_custom_call.1} parent=5 // pred_region
        // Predicated region
        $region17: #{tpu_custom_call.1} parent=15 // pred_check
          %p132 = pneg %p51
        $region18: #{tpu_custom_call.1} parent=15 // pred_check_branch
          %134 = sbr.rel (%p132) target = $region20
        $region19: #{tpu_custom_call.1} parent=15 // pred_region
          %s135 = sand.u32 %s41, 1
          %s136 = scalar_lea.sflag [#allocation3], %s135
          %s137 = sand.u32 %s41, 1
          %s138 = smul.addr %s137, 32
          %s139 = scalar_lea.vmem [#allocation2], %s138
          %s140 = smul.u32 2, %s25
          %142 = vsyncadd %s136, 0
          %s143 = smul.addr %s24, 4
          %s144 = sadd.s32 %s140, %s143
          %s145 = smul.addr %s144, 8
          %s146 = scalar_lea.hbm %s0, %s145
          %s147 = sshll.u32 %s146, 4
          %s148 = int_to_ptr.hbm [resolvable:$true] %s147
          %s149 = sshll.u32 %s139, 4
          %s150 = int_to_ptr.vmem [resolvable:$true] %s149
          %155 = dma.hbm_to_vmem [thread:$0]  %s148, 512, %s150, %s136, 256, 256, 16
        $region20: #{tpu_custom_call.1} parent=15 // pred_fallthru
          _
        // Predicated region
        $region21: #{tpu_custom_call.1} parent=15 // pred_check
          %p156 = pneg %p79
        $region22: #{tpu_custom_call.1} parent=15 // pred_check_branch
          %158 = sbr.rel (%p156) target = $region24
        $region23: #{tpu_custom_call.1} parent=15 // pred_region
          %s159 = sand.u32 %s69, 1
          %s160 = scalar_lea.sflag [#allocation6], %s159
          %s161 = sand.u32 %s69, 1
          %s162 = smul.addr %s161, 32
          %s163 = scalar_lea.vmem [#allocation5], %s162
          %s164 = smul.u32 2, %s25
          %166 = vsyncadd %s160, 0
          %s167 = smul.addr %s24, 4
          %s168 = sadd.s32 %s164, %s167
          %s169 = smul.addr %s168, 8
          %s170 = scalar_lea.hbm %s1, %s169
          %s171 = sshll.u32 %s170, 4
          %s172 = int_to_ptr.hbm [resolvable:$true] %s171
          %s173 = sshll.u32 %s163, 4
          %s174 = int_to_ptr.vmem [resolvable:$true] %s173
          %179 = dma.hbm_to_vmem [thread:$0]  %s172, 512, %s174, %s160, 256, 256, 16
        $region24: #{tpu_custom_call.1} parent=15 // pred_fallthru
          _
      $region16: #{tpu_custom_call.1} parent=5 // pred_fallthru
        _
      %p180 = scmp.le.s32.totalorder 1, %s17
      %p181 = scmp.lt.s32.totalorder %s17, 3
      %p182 = pnand %p180, %p181
      %p183 = pneg %p182
      // Predicated region
      $region25: #{tpu_custom_call.1} parent=5 // pred_check
        _
      $region26: #{tpu_custom_call.1} parent=5 // pred_check_branch
        %185 = sbr.rel (%p182) target = $region28
      $region27: #{tpu_custom_call.1} parent=5 // pred_region
        %s186 = ssub.s32 %s17, 1
        %s187 = sand.u32 %s44, 1
        %s188 = scalar_lea.sflag [#allocation3], %s187
        %s189 = sand.u32 %s44, 1
        %s190 = smul.addr %s189, 32
        %s191 = scalar_lea.vmem [#allocation2], %s190
        // Predicated region
        $region29: #{tpu_custom_call.1} parent=27 // pred_check
          %p192 = pneg %p57
        $region30: #{tpu_custom_call.1} parent=27 // pred_check_branch
          %194 = sbr.rel (%p192) target = $region32
        $region31: #{tpu_custom_call.1} parent=27 // pred_region
          %196 = dma.done %s188, 512
        $region32: #{tpu_custom_call.1} parent=27 // pred_fallthru
          _
        %s197 = sand.u32 %s72, 1
        %s198 = scalar_lea.sflag [#allocation6], %s197
        %s199 = sand.u32 %s72, 1
        %s200 = smul.addr %s199, 32
        %s201 = scalar_lea.vmem [#allocation5], %s200
        // Predicated region
        $region33: #{tpu_custom_call.1} parent=27 // pred_check
          %p202 = pneg %p85
        $region34: #{tpu_custom_call.1} parent=27 // pred_check_branch
          %204 = sbr.rel (%p202) target = $region36
        $region35: #{tpu_custom_call.1} parent=27 // pred_region
          %206 = dma.done %s198, 512
        $region36: #{tpu_custom_call.1} parent=27 // pred_fallthru
          _
        %s207 = sand.u32 %s44, 1
        %s208 = scalar_lea.sflag [#allocation3], %s207
        %s209 = sand.u32 %s44, 1
        %s210 = smul.addr %s209, 32
        %s211 = scalar_lea.vmem [#allocation2], %s210
        %p212 = pneg %p57
        %p213 = pneg %p54
        %s214 = sand.u32 %s72, 1
        %s215 = scalar_lea.sflag [#allocation6], %s214
        %s216 = sand.u32 %s72, 1
        %s217 = smul.addr %s216, 32
        %s218 = scalar_lea.vmem [#allocation5], %s217
        %p219 = pneg %p85
        %p220 = pneg %p82
        %p221 = pneg %p113
        %p222 = pneg %p110
        %s223 = sand.u32 %s100, 1
        %s224 = scalar_lea.sflag [#allocation4], %s223
        %s225 = sand.u32 %s100, 1
        %s226 = smul.addr %s225, 64
        %s227 = scalar_lea.vmem [#allocation7], %s226
        %s228 = smul.u32 2, %s27
        %s229 = smul.u32 2, %s27
        %s230 = smul.u32 2, %s27
        %v231 = vld [vmem:[%s191] sm:$0xff]
        %v232 = vld [vmem:[%s191 + $0x8] sm:$0xff]
        %v233 = vld [vmem:[%s191 + $0x10] sm:$0xff]
        %v234 = vld [vmem:[%s191 + $0x18] sm:$0xff]
        %235 = vst [vmem:[%s227] sm:$0xff] %v231
        %236 = vst [vmem:[%s227 + $0x8] sm:$0xff] %v232
        %237 = vst [vmem:[%s227 + $0x10] sm:$0xff] %v233
        %238 = vst [vmem:[%s227 + $0x18] sm:$0xff] %v234
        %v239 = vld [vmem:[%s201] sm:$0xff]
        %v240 = vld [vmem:[%s201 + $0x8] sm:$0xff]
        %v241 = vld [vmem:[%s201 + $0x10] sm:$0xff]
        %v242 = vld [vmem:[%s201 + $0x18] sm:$0xff]
        %243 = vst [vmem:[%s227 + $0x20] sm:$0xff] %v239
        %244 = vst [vmem:[%s227 + $0x28] sm:$0xff] %v240
        %245 = vst [vmem:[%s227 + $0x30] sm:$0xff] %v241
        %246 = vst [vmem:[%s227 + $0x38] sm:$0xff] %v242
        %s247 = sand.u32 %s100, 1
        %s248 = scalar_lea.sflag [#allocation4], %s247
        %s249 = sand.u32 %s100, 1
        %s250 = smul.addr %s249, 64
        %s251 = scalar_lea.vmem [#allocation7], %s250
        // Predicated region
        $region37: #{tpu_custom_call.1} parent=27 // pred_check
          %p252 = pneg %p110
        $region38: #{tpu_custom_call.1} parent=27 // pred_check_branch
          %254 = sbr.rel (%p252) target = $region40
        $region39: #{tpu_custom_call.1} parent=27 // pred_region
          %s255 = smul.u32 2, %s27
          %257 = vsyncadd %s248, 0
          %s258 = smul.addr %s26, 8
          %s259 = sadd.s32 %s255, %s258
          %s260 = smul.addr %s259, 8
          %s261 = scalar_lea.hbm %s2, %s260
          %s262 = sshll.u32 %s251, 4
          %s263 = int_to_ptr.vmem [resolvable:$true] %s262
          %s264 = sshll.u32 %s261, 4
          %s265 = int_to_ptr.hbm [resolvable:$true] %s264
          %270 = dma.vmem_to_hbm [thread:$0]  %s263, 1024, %s265, %s248, 256, 256, 16
        $region40: #{tpu_custom_call.1} parent=27 // pred_fallthru
          _
      $region28: #{tpu_custom_call.1} parent=5 // pred_fallthru
        _
      %p271 = scmp.le.s32.totalorder 2, %s17
      // Predicated region
      $region41: #{tpu_custom_call.1} parent=5 // pred_check
        %p272 = pneg %p271
      $region42: #{tpu_custom_call.1} parent=5 // pred_check_branch
        %274 = sbr.rel (%p272) target = $region44
      $region43: #{tpu_custom_call.1} parent=5 // pred_region
        %s275 = ssub.s32 %s17, 2
        // Predicated region
        $region45: #{tpu_custom_call.1} parent=43 // pred_check
          %p276 = pneg %p116
        $region46: #{tpu_custom_call.1} parent=43 // pred_check_branch
          %278 = sbr.rel (%p276) target = $region48
        $region47: #{tpu_custom_call.1} parent=43 // pred_region
          %s279 = sand.u32 %s101, 1
          %s280 = scalar_lea.sflag [#allocation4], %s279
          %s281 = sand.u32 %s101, 1
          %s282 = smul.addr %s281, 64
          %s283 = scalar_lea.vmem [#allocation7], %s282
          %285 = dma.done %s280, 1024
        $region48: #{tpu_custom_call.1} parent=43 // pred_fallthru
          _
      $region44: #{tpu_custom_call.1} parent=5 // pred_fallthru
        _
    $region6: #{tpu_custom_call.1} parent=1 // loop_footer
      %s21 = sadd.s32 1, %s17
    $region7: #{tpu_custom_call.1} parent=1 // loop_footer_branch
      %16 = sbr.rel target = $region3
    $region8: #{tpu_custom_call.1} parent=1 // loop_exit
      _
    %286 = vsyncpa [#allocation3], 1
    %s287 = scalar_lea.sflag [#allocation3], 1
    %288 = vsyncpa %s287, 1
    %289 = vsyncpa [#allocation6], 1
    %s290 = scalar_lea.sflag [#allocation6], 1
    %291 = vsyncpa %s290, 1
    %292 = vsyncpa [#allocation4], 1
    %s293 = scalar_lea.sflag [#allocation4], 1
    %294 = vsyncpa %s293, 1

</llo_original>
